<compile_context>
chip_gen: v5e
topology: v5e:2x2
jax: 0.10.0
libtpu: 0.0.40
codegen_flags: <defaults>
</compile_context>

<pallas_src>
import jax
import jax.numpy as jnp
from jax.experimental import pallas as pl
from jax.experimental.pallas import tpu as pltpu


def _round_up(v, m):
    return (v + m - 1) // m * m


def _patch_embed_kernel(p_ref, w_ref, b_ref, o_ref):
    # p_ref : (TM, K)  streamed tile of flattened patches (compute dtype)
    # w_ref : (K, E)   resident flattened conv weight      (compute dtype)
    # b_ref : (1, E)   resident bias                        (float32)
    # o_ref : (TM, E)  output tile; cast to the narrow output dtype here
    acc = jnp.dot(p_ref[...], w_ref[...], preferred_element_type=jnp.float32)
    o_ref[...] = (acc + b_ref[...]).astype(o_ref.dtype)


def patch_embed_forward(x, weight, bias, patch_size, *,
                        compute_dtype=jnp.bfloat16, out_dtype=None,
                        tile_m=2048):
    """PatchEmbed forward (norm_layer=None).

    x      : (B, C, H, W)   NCHW input (as in the PyTorch module)
    weight : (E, C, ph, pw) Conv2d weight with kernel_size == stride == patch
    bias   : (E,)
    returns (B, Ho*Wo, E)  ==  proj(x).flatten(2).transpose(1, 2)
    """
    B, C, H, W = x.shape
    ph, pw = patch_size
    E = weight.shape[0]
    Ho, Wo = H // ph, W // pw
    N = B * Ho * Wo
    K = C * ph * pw
    if out_dtype is None:
        out_dtype = compute_dtype

    if H != Ho * ph or W != Wo * pw:          # Conv2d floors; crop the remainder
        x = x[:, :, :Ho * ph, :Wo * pw]

    # --- im2col glue: single fused XLA transpose/copy, emitted in the compute
    # dtype.  Row order (b, i, j); column order (c, kh, kw) == weight.reshape(E,K).
    patches = x.reshape(B, C, Ho, ph, Wo, pw).transpose(0, 2, 4, 1, 3, 5)
    patches = patches.reshape(N, K).astype(compute_dtype)

    w_flat = weight.reshape(E, K).T.astype(compute_dtype)     # (K, E)
    b_flat = bias.astype(jnp.float32).reshape(1, E)           # (1, E)

    # Row tiling: large tiles amortize the per-grid-step overhead; keep >= 2
    # grid steps (when N allows) so a v7x megacore can split the parallel row
    # axis across both TensorCores.  N is NOT padded: the grid is cdiv and
    # Pallas masks the ragged last block.  (On v7x, tile_m=4096 is also fine.)
    tm = min(tile_m, _round_up(N, 8))
    if N > 8:
        tm = min(tm, _round_up(pl.cdiv(N, 2), 8))
    tm = max(tm, 8)
    grid = (pl.cdiv(N, tm),)

    in_bytes = jnp.dtype(compute_dtype).itemsize
    out_bytes = jnp.dtype(out_dtype).itemsize

    # Double-buffered working set; raise the scoped-VMEM limit only if it gets
    # close to the smallest default (16 MiB on v5e).
    vmem_need = 2 * (tm * K * in_bytes + tm * E * out_bytes
                     + K * E * in_bytes + E * 4)
    vmem_limit = None
    if vmem_need > 12 * 1024 * 1024:
        vmem_limit = min(int(vmem_need * 3 // 2), 48 * 1024 * 1024)

    bytes_accessed = (N * K * in_bytes + K * E * in_bytes + E * 4
                      + N * E * out_bytes)

    out = pl.pallas_call(
        _patch_embed_kernel,
        out_shape=jax.ShapeDtypeStruct((N, E), out_dtype),
        grid=grid,
        in_specs=[
            # Streamed patch tiles (double-buffered by the Pallas pipeline;
            # pl.Buffered(3) only if a profile shows exposed input DMA).
            pl.BlockSpec((tm, K), lambda i: (i, 0)),
            pl.BlockSpec((K, E), lambda i: (0, 0)),    # resident weight
            pl.BlockSpec((1, E), lambda i: (0, 0)),    # resident bias
        ],
        out_specs=pl.BlockSpec((tm, E), lambda i: (i, 0)),
        compiler_params=pltpu.CompilerParams(
            dimension_semantics=("parallel",),
            vmem_limit_bytes=vmem_limit),
        cost_estimate=pl.CostEstimate(
            flops=2 * N * K * E,
            transcendentals=0,
            bytes_accessed=int(bytes_accessed)),
    )(patches, w_flat, b_flat)

    # Free row-major reinterpretation (no transpose, no extra pass).
    return out.reshape(B, Ho * Wo, E)


def _reference(x, weight, bias, patch_size):
    # Pure-JAX reference: strided conv via lax.conv_general_dilated (NCHW, OIHW).
    y = jax.lax.conv_general_dilated(
        x, weight, window_strides=patch_size, padding="VALID",
        dimension_numbers=("NCHW", "OIHW", "NCHW"))
    y = y + bias.reshape(1, -1, 1, 1)
    B, E, Ho, Wo = y.shape
    return y.reshape(B, E, Ho * Wo).transpose(0, 2, 1)


if __name__ == "__main__":
    patch_size = (4, 4)
    embed_dim = 32

    key = jax.random.PRNGKey(0)
    kx, kw, kb, kx2 = jax.random.split(key, 4)

    # Small shapes consistent with the module usage:
    # batch=2, in_chans=4, 16x16 input, patch 4x4, embed_dim 32.
    B, C, H, W = 2, 4, 16, 16
    x = jax.random.normal(kx, (B, C, H, W), dtype=jnp.float32)
    weight = jax.random.normal(
        kw, (embed_dim, C, patch_size[0], patch_size[1]), dtype=jnp.float32) * 0.02
    bias = jax.random.normal(kb, (embed_dim,), dtype=jnp.float32) * 0.02

    ref = _reference(x, weight, bias, patch_size)
    n_patches = (H // patch_size[0]) * (W // patch_size[1])

    # Float32 compute/output path: exact check against the conv reference.
    out_f32 = patch_embed_forward(x, weight, bias, patch_size,
                                  compute_dtype=jnp.float32)
    out_f32 = jax.block_until_ready(out_f32)
    assert out_f32.shape == (B, n_patches, embed_dim)
    assert out_f32.dtype == jnp.float32
    assert jnp.allclose(out_f32, ref, atol=1e-4, rtol=1e-4), "f32 mismatch vs reference"

    # Default bandwidth-optimized path: bf16 compute, bf16 output cast in-kernel.
    out_bf16 = patch_embed_forward(x, weight, bias, patch_size)
    out_bf16 = jax.block_until_ready(out_bf16)
    assert out_bf16.shape == (B, n_patches, embed_dim)
    assert out_bf16.dtype == jnp.bfloat16
    assert jnp.allclose(out_bf16.astype(jnp.float32), ref, atol=3e-2, rtol=3e-2), \
        "bf16 mismatch vs reference"

    # Ragged row count (N=40, tm=24 -> 2 grid steps, masked last block):
    # exercises the path that replaced the pad-N / slice-[:N] HBM passes.
    H2, W2 = 20, 16
    x2 = jax.random.normal(kx2, (B, C, H2, W2), dtype=jnp.float32)
    ref2 = _reference(x2, weight, bias, patch_size)
    out2 = patch_embed_forward(x2, weight, bias, patch_size,
                               compute_dtype=jnp.float32)
    out2 = jax.block_until_ready(out2)
    n_patches2 = (H2 // patch_size[0]) * (W2 // patch_size[1])
    assert out2.shape == (B, n_patches2, embed_dim)
    assert jnp.allclose(out2, ref2, atol=1e-4, rtol=1e-4), "ragged-N mismatch vs reference"

    print("KERNEL_OK")
</pallas_src>

<mosaic_0001>
module attributes {stable_mosaic.version = 11 : i64} {
  func.func @_patch_embed_kernel(%arg0: i32, %arg1: memref<16x64xf32, #tpu.memory_space<vmem>>, %arg2: memref<64x32xf32, #tpu.memory_space<vmem>>, %arg3: memref<1x32xf32, #tpu.memory_space<vmem>>, %arg4: memref<16x32xf32, #tpu.memory_space<vmem>>) attributes {dimension_semantics = [#tpu.dimension_semantics<parallel>], iteration_bounds = array<i64: 2>, scalar_prefetch = 0 : i64, scratch_operands = 0 : i64, tpu.core_type = #tpu.core_type<tc>, window_params = [{transform_indices = @transform_0, window_bounds = array<i64: 16, 64>}, {pipeline_mode = #tpu.pipeline_mode<synchronous>, transform_indices = @transform_1, window_bounds = array<i64: 64, 32>}, {pipeline_mode = #tpu.pipeline_mode<synchronous>, transform_indices = @transform_2, window_bounds = array<i64: 1, 32>}, {transform_indices = @transform_3, window_bounds = array<i64: 16, 32>}]} {
    %c0 = arith.constant 0 : index
    %c0_0 = arith.constant 0 : index
    %0 = vector.load %arg1[%c0, %c0_0] : memref<16x64xf32, #tpu.memory_space<vmem>>, vector<16x64xf32>
    %c0_1 = arith.constant 0 : index
    %c0_2 = arith.constant 0 : index
    %1 = vector.load %arg2[%c0_1, %c0_2] : memref<64x32xf32, #tpu.memory_space<vmem>>, vector<64x32xf32>
    %cst = arith.constant dense<0.000000e+00> : vector<16x32xf32>
    %2 = tpu.matmul %0, %1, %cst {dimension_numbers = #tpu.dot_dimension_numbers<[1], [0], [0], [1], [0, 0, 1, 1], [], []>} : vector<16x64xf32>, vector<64x32xf32>, vector<16x32xf32> -> vector<16x32xf32>
    %c0_3 = arith.constant 0 : index
    %c0_4 = arith.constant 0 : index
    %3 = vector.load %arg3[%c0_3, %c0_4] : memref<1x32xf32, #tpu.memory_space<vmem>>, vector<1x32xf32>
    %4 = vector.broadcast %3 : vector<1x32xf32> to vector<16x32xf32>
    %5 = arith.addf %2, %4 : vector<16x32xf32>
    %c0_5 = arith.constant 0 : index
    %c0_6 = arith.constant 0 : index
    %6 = vector.load %arg4[%c0_5, %c0_6] : memref<16x32xf32, #tpu.memory_space<vmem>>, vector<16x32xf32>
    tpu.vector_store %arg4[%c0_5, %c0_6], %5 {strides = array<i32>} : memref<16x32xf32, #tpu.memory_space<vmem>>, vector<16x32xf32>,
    return
  }
  func.func @transform_0(%arg0: i32) -> (i32, i32) {
    %c0_i32 = arith.constant 0 : i32
    %c0_i32_0 = arith.constant 0 : i32
    return %arg0, %c0_i32 : i32, i32
  }
  func.func @transform_1(%arg0: i32) -> (i32, i32) {
    %c0_i32 = arith.constant 0 : i32
    %c0_i32_0 = arith.constant 0 : i32
    %c0_i32_1 = arith.constant 0 : i32
    return %c0_i32, %c0_i32_0 : i32, i32
  }
  func.func @transform_2(%arg0: i32) -> (i32, i32) {
    %c0_i32 = arith.constant 0 : i32
    %c0_i32_0 = arith.constant 0 : i32
    %c0_i32_1 = arith.constant 0 : i32
    return %c0_i32, %c0_i32_0 : i32, i32
  }
  func.func @transform_3(%arg0: i32) -> (i32, i32) {
    %c0_i32 = arith.constant 0 : i32
    %c0_i32_0 = arith.constant 0 : i32
    return %arg0, %c0_i32 : i32, i32
  }
}

</mosaic_0001>

<llo_original>
// kernel: tpu_custom_call.1
$region0: #{tpu_custom_call.1}
  #allocation0 [shape = 'u32[]', space=smem, size = 0x4, offset = 0x4, fixed_abs, tag = 'smem constant byte address 0x4 - core index']
  #allocation1 [shape = 'u32[72,128]{1,0:T(1,128)}', space=vmem, size = 0x9000, scoped, tag = 'internal scratch']
  %s0 = inlined_call_operand.vmem [shape: f32[32,64], index: 0, kind: input, shape index: {}]
  %s1 = inlined_call_operand.vmem [shape: f32[64,32], index: 1, kind: input, shape index: {}]
  %s2 = inlined_call_operand.vmem [shape: f32[1,32], index: 2, kind: input, shape index: {}]
  %s3 = inlined_call_operand.hbm [shape: f32[32,32], index: 3, kind: output, shape index: {}]
  %s4 = sld [smem:[#allocation0]]
  $region45: #{tpu_custom_call.1} parent=0
    _
  %s6 = ssub.s32 1, %s4
  %s7 = scalar_select 0, %s6, %s4
  $region1: #{tpu_custom_call.1} parent=0
    #allocation2 [shape = 'u8[16384]{0}', space=vmem, size = 0x4000, scoped, tag = 'output window, operand 0']
    #allocation3 [shape = 's32[2]{0}', space=sflag, size = 0x8, scoped, tag = 'scoped memory for tpu_custom_call.1']
    %8 = vsyncpa [#allocation3], 0
    %s9 = scalar_lea.sflag [#allocation3], 1
    %10 = vsyncpa %s9, 0
    loop: start=0, step=1, limit=4
    $region2: #{tpu_custom_call.1} parent=1 // loop_pre_header
      _
    $region3: #{tpu_custom_call.1} parent=1 // loop_header
      %s12 = sphi 0, %s16
      %p13 = scmp.ge.s32.totalorder %s12, 4
      %s22 = sphi 0, %s24
      %s25 = sphi 0, %s22
      %s26 = sphi 0, %s25
      %s42 = sphi 0, %s26
      %s46 = sphi 0, %s46
      %s48 = sphi 0, %s46
      %s49 = sphi 0, %s48
      %s63 = sphi 0, %s49
      %s67 = sphi 0, %s67
      %s69 = sphi 0, %s67
      %s70 = sphi 0, %s69
      %s84 = sphi 0, %s70
      %s90 = sphi 0, %s92
      %s93 = sphi 0, %s90
      %s94 = sphi 0, %s93
      %s110 = sphi 0, %s94
    $region4: #{tpu_custom_call.1} parent=1 // loop_header_branch
      %15 = sbr.rel (%p13) target = $region8
    $region5: #{tpu_custom_call.1} parent=1 // loop_body
      %s17 = ssub.s32 %s12, 1
      %s18 = ssub.s32 %s12, 2
      %s19 = sadd.s32 %s12, 1
      %s20 = ssub.s32 %s12, %s19
      %p21 = scmp.eq.s32.totalorder %s20, 0
      %s23 = sadd.s32 %s22, 1
      %s24 = scalar_select %p21, %s22, %s23
      %p27 = pneg %p21
      %p28 = scmp.eq.s32.totalorder %s12, 1
      %p29 = por %p27, %p28
      %p30 = scmp.ne.s32.totalorder %s22, %s25
      %p31 = scmp.eq.s32.totalorder %s12, 0
      %p32 = por %p30, %p31
      %p33 = scmp.ne.s32.totalorder %s22, %s25
      %p34 = scmp.eq.s32.totalorder %s17, 1
      %p35 = por %p33, %p34
      %p36 = scmp.ne.s32.totalorder %s25, %s26
      %p37 = scmp.eq.s32.totalorder %s17, 0
      %p38 = por %p36, %p37
      %p39 = scmp.ne.s32.totalorder %s25, %s26
      %p40 = scmp.eq.s32.totalorder %s18, 1
      %p41 = por %p39, %p40
      %p43 = scmp.ne.s32.totalorder %s26, %s42
      %p44 = scmp.eq.s32.totalorder %s18, 0
      %p45 = por %p43, %p44
      %s47 = sadd.s32 %s46, 1
      %p50 = scmp.eq.s32.totalorder %s12, 1
      %p51 = scmp.ne.s32.totalorder %s46, %s48
      %p52 = scmp.eq.s32.totalorder %s12, 0
      %p53 = por %p51, %p52
      %p54 = scmp.ne.s32.totalorder %s46, %s48
      %p55 = scmp.eq.s32.totalorder %s17, 1
      %p56 = por %p54, %p55
      %p57 = scmp.ne.s32.totalorder %s48, %s49
      %p58 = scmp.eq.s32.totalorder %s17, 0
      %p59 = por %p57, %p58
      %p60 = scmp.ne.s32.totalorder %s48, %s49
      %p61 = scmp.eq.s32.totalorder %s18, 1
      %p62 = por %p60, %p61
      %p64 = scmp.ne.s32.totalorder %s49, %s63
      %p65 = scmp.eq.s32.totalorder %s18, 0
      %p66 = por %p64, %p65
      %s68 = sadd.s32 %s67, 1
      %p71 = scmp.eq.s32.totalorder %s12, 1
      %p72 = scmp.ne.s32.totalorder %s67, %s69
      %p73 = scmp.eq.s32.totalorder %s12, 0
      %p74 = por %p72, %p73
      %p75 = scmp.ne.s32.totalorder %s67, %s69
      %p76 = scmp.eq.s32.totalorder %s17, 1
      %p77 = por %p75, %p76
      %p78 = scmp.ne.s32.totalorder %s69, %s70
      %p79 = scmp.eq.s32.totalorder %s17, 0
      %p80 = por %p78, %p79
      %p81 = scmp.ne.s32.totalorder %s69, %s70
      %p82 = scmp.eq.s32.totalorder %s18, 1
      %p83 = por %p81, %p82
      %p85 = scmp.ne.s32.totalorder %s70, %s84
      %p86 = scmp.eq.s32.totalorder %s18, 0
      %p87 = por %p85, %p86
      %s88 = ssub.s32 %s12, %s19
      %p89 = scmp.eq.s32.totalorder %s88, 0
      %s91 = sadd.s32 %s90, 1
      %s92 = scalar_select %p89, %s90, %s91
      %p95 = pneg %p89
      %p96 = scmp.eq.s32.totalorder %s12, 1
      %p97 = por %p95, %p96
      %p98 = scmp.ne.s32.totalorder %s90, %s93
      %p99 = scmp.eq.s32.totalorder %s12, 0
      %p100 = por %p98, %p99
      %p101 = scmp.ne.s32.totalorder %s90, %s93
      %p102 = scmp.eq.s32.totalorder %s17, 1
      %p103 = por %p101, %p102
      %p104 = scmp.ne.s32.totalorder %s93, %s94
      %p105 = scmp.eq.s32.totalorder %s17, 0
      %p106 = por %p104, %p105
      %p107 = scmp.ne.s32.totalorder %s93, %s94
      %p108 = scmp.eq.s32.totalorder %s18, 1
      %p109 = por %p107, %p108
      %p111 = scmp.ne.s32.totalorder %s94, %s110
      %p112 = scmp.eq.s32.totalorder %s18, 0
      %p113 = por %p111, %p112
      %p114 = scmp.le.s32.totalorder 1, %s12
      %p115 = scmp.lt.s32.totalorder %s12, 3
      %p116 = pnand %p114, %p115
      %p117 = pneg %p116
      // Predicated region
      $region9: #{tpu_custom_call.1} parent=5 // pred_check
        _
      $region10: #{tpu_custom_call.1} parent=5 // pred_check_branch
        %119 = sbr.rel (%p116) target = $region12
      $region11: #{tpu_custom_call.1} parent=5 // pred_region
        %s120 = ssub.s32 %s12, 1
        // Predicated region
        $region13: #{tpu_custom_call.1} parent=11 // pred_check
          %p121 = pneg %p59
        $region14: #{tpu_custom_call.1} parent=11 // pred_check_branch
          %123 = sbr.rel (%p121) target = $region16
        $region15: #{tpu_custom_call.1} parent=11 // pred_region
          _
        $region16: #{tpu_custom_call.1} parent=11 // pred_fallthru
          _
        // Predicated region
        $region17: #{tpu_custom_call.1} parent=11 // pred_check
          %p124 = pneg %p80
        $region18: #{tpu_custom_call.1} parent=11 // pred_check_branch
          %126 = sbr.rel (%p124) target = $region20
        $region19: #{tpu_custom_call.1} parent=11 // pred_region
          _
        $region20: #{tpu_custom_call.1} parent=11 // pred_fallthru
          _
      $region12: #{tpu_custom_call.1} parent=5 // pred_fallthru
        _
      %p127 = scmp.lt.s32.totalorder %s12, 2
      // Predicated region
      $region21: #{tpu_custom_call.1} parent=5 // pred_check
        %p128 = pneg %p127
      $region22: #{tpu_custom_call.1} parent=5 // pred_check_branch
        %130 = sbr.rel (%p128) target = $region24
      $region23: #{tpu_custom_call.1} parent=5 // pred_region
        // Predicated region
        $region25: #{tpu_custom_call.1} parent=23 // pred_check
          %p131 = pneg %p32
        $region26: #{tpu_custom_call.1} parent=23 // pred_check_branch
          %133 = sbr.rel (%p131) target = $region28
        $region27: #{tpu_custom_call.1} parent=23 // pred_region
          %s134 = smul.u32 2, %s12
          %p135 = scmp.lt.s32.totalorder %s134, 3
          %s136 = scalar_select %p135, %s134, 3
          %s137 = smul.addr %s136, 8
          %s138 = scalar_lea.vmem %s0, %s137
          %s139 = smul.u32 2, %s12
        $region28: #{tpu_custom_call.1} parent=23 // pred_fallthru
          _
      $region24: #{tpu_custom_call.1} parent=5 // pred_fallthru
        _
      %p140 = scmp.le.s32.totalorder 1, %s12
      %p141 = scmp.lt.s32.totalorder %s12, 3
      %p142 = pnand %p140, %p141
      %p143 = pneg %p142
      // Predicated region
      $region29: #{tpu_custom_call.1} parent=5 // pred_check
        _
      $region30: #{tpu_custom_call.1} parent=5 // pred_check_branch
        %145 = sbr.rel (%p142) target = $region32
      $region31: #{tpu_custom_call.1} parent=5 // pred_region
        %s146 = ssub.s32 %s12, 1
        %s147 = smul.u32 2, %s17
        %p148 = scmp.lt.s32.totalorder %s147, 3
        %s149 = scalar_select %p148, %s147, 3
        %s150 = smul.addr %s149, 8
        %s151 = scalar_lea.vmem %s0, %s150
        %p152 = pneg %p38
        %p153 = pneg %p35
        %p154 = pneg %p59
        %p155 = pneg %p56
        %p156 = pneg %p80
        %p157 = pneg %p77
        %p158 = pneg %p106
        %p159 = pneg %p103
        %s160 = sand.u32 %s93, 1
        %s161 = scalar_lea.sflag [#allocation3], %s160
        %s162 = sand.u32 %s93, 1
        %s163 = smul.addr %s162, 16
        %s164 = scalar_lea.vmem [#allocation2], %s163
        %s165 = smul.u32 2, %s17
        %p166 = scmp.lt.s32.totalorder %s165, 3
        %s167 = scalar_select %p166, %s165, 3
        %s168 = smul.addr %s167, 8
        %s169 = scalar_lea.vmem %s0, %s168
        %s170 = smul.u32 2, %s17
        %s171 = smul.u32 2, %s17
        %v172 = vld [vmem:[%s169] sm:$0xff]
        %v173 = vld [vmem:[%s169 + $0x8] sm:$0xff]
        %v174 = vld [vmem:[%s1] sm:$0xff]
        %v175 = vld [vmem:[%s1 + $0x8] sm:$0xff]
        %v176 = vld [vmem:[%s1 + $0x10] sm:$0xff]
        %v177 = vld [vmem:[%s1 + $0x18] sm:$0xff]
        %v178 = vld [vmem:[%s1 + $0x20] sm:$0xff]
        %v179 = vld [vmem:[%s1 + $0x28] sm:$0xff]
        %v180 = vld [vmem:[%s1 + $0x30] sm:$0xff]
        %v181 = vld [vmem:[%s1 + $0x38] sm:$0xff]
        %v182 = vld [vmem:[%s2] sm:$0x1]
        %v184 = vperm.slane %v182, 0
        %vm186 = vcmask 523264
        %v188 = vsel %vm186, %v172, 0
        %v191 = vsel %vm186, %v173, 0
        %193 = vmatpush.msra.mxu0 0.0
        %194 = vmatpush.msra.mxu0 0.0
        %195 = vmatpush.msra.mxu0 0.0
        %196 = vmatpush.msra.mxu0 0.0
        %197 = vmatpush.msra.mxu0 0.0
        %198 = vmatpush.msra.mxu0 0.0
        %199 = vmatpush.msra.mxu0 0.0
        %200 = vmatpush.msra.mxu0 0.0
        %201 = vmatpush.msra.mxu0 %v181
        %202 = vmatpush.msra.mxu0 %v180
        %203 = vmatpush.msra.mxu0 %v179
        %204 = vmatpush.msra.mxu0 %v178
        %205 = vmatpush.msra.mxu0 %v177
        %206 = vmatpush.msra.mxu0 %v176
        %207 = vmatpush.msra.mxu0 %v175
        %208 = vmatpush.msra.mxu0 %v174
        %209 = vmatmul.f32.gmra.mxu0 %v188
        %v210 = vpop.f32.mrf.mxu0
        %v211 = vadd.f32 %v184, %v210
        %212 = vmatmul.f32.gmra.mxu0 %v191
        %v213 = vpop.f32.mrf.mxu0
        %v214 = vadd.f32 %v184, %v213
        %215 = vdwg.mxu0
        %vm216 = vcmask 261120
        %217 = vst.msk [vmem:[%s164] sm:$0xff] %vm216, %v211
        %218 = vst.msk [vmem:[%s164 + $0x8] sm:$0xff] %vm216, %v214
        %s219 = sand.u32 %s93, 1
        %s220 = scalar_lea.sflag [#allocation3], %s219
        %s221 = sand.u32 %s93, 1
        %s222 = smul.addr %s221, 16
        %s223 = scalar_lea.vmem [#allocation2], %s222
        // Predicated region
        $region33: #{tpu_custom_call.1} parent=31 // pred_check
          %p224 = pneg %p103
        $region34: #{tpu_custom_call.1} parent=31 // pred_check_branch
          %226 = sbr.rel (%p224) target = $region36
        $region35: #{tpu_custom_call.1} parent=31 // pred_region
          %s227 = smul.u32 2, %s17
          %229 = vsyncadd %s220, 0
          %s230 = smul.addr %s227, 8
          %s231 = scalar_lea.hbm %s3, %s230
          %s232 = sshll.u32 %s223, 4
          %s233 = int_to_ptr.vmem [resolvable:$true] %s232
          %s234 = sshll.u32 %s231, 4
          %s235 = int_to_ptr.hbm [resolvable:$true] %s234
          %240 = dma.vmem_to_hbm [thread:$0]  %s233, 256, %s235, %s220, 128, 128, 8
        $region36: #{tpu_custom_call.1} parent=31 // pred_fallthru
          _
      $region32: #{tpu_custom_call.1} parent=5 // pred_fallthru
        _
      %p241 = scmp.le.s32.totalorder 2, %s12
      // Predicated region
      $region37: #{tpu_custom_call.1} parent=5 // pred_check
        %p242 = pneg %p241
      $region38: #{tpu_custom_call.1} parent=5 // pred_check_branch
        %244 = sbr.rel (%p242) target = $region40
      $region39: #{tpu_custom_call.1} parent=5 // pred_region
        %s245 = ssub.s32 %s12, 2
        // Predicated region
        $region41: #{tpu_custom_call.1} parent=39 // pred_check
          %p246 = pneg %p109
        $region42: #{tpu_custom_call.1} parent=39 // pred_check_branch
          %248 = sbr.rel (%p246) target = $region44
        $region43: #{tpu_custom_call.1} parent=39 // pred_region
          %s249 = sand.u32 %s94, 1
          %s250 = scalar_lea.sflag [#allocation3], %s249
          %s251 = sand.u32 %s94, 1
          %s252 = smul.addr %s251, 16
          %s253 = scalar_lea.vmem [#allocation2], %s252
          %255 = dma.done %s250, 256
        $region44: #{tpu_custom_call.1} parent=39 // pred_fallthru
          _
      $region40: #{tpu_custom_call.1} parent=5 // pred_fallthru
        _
    $region6: #{tpu_custom_call.1} parent=1 // loop_footer
      %s16 = sadd.s32 1, %s12
    $region7: #{tpu_custom_call.1} parent=1 // loop_footer_branch
      %11 = sbr.rel target = $region3
    $region8: #{tpu_custom_call.1} parent=1 // loop_exit
      _
    %256 = vsyncpa [#allocation3], 1
    %s257 = scalar_lea.sflag [#allocation3], 1
    %258 = vsyncpa %s257, 1

</llo_original>
